<compile_context>
chip_gen: v5e
topology: v5e:2x2
jax: 0.10.0
libtpu: 0.0.40
codegen_flags: <defaults>
</compile_context>

<pallas_src>
import functools

import jax
import jax.numpy as jnp
from jax.experimental import pallas as pl
from jax.experimental.pallas import tpu as pltpu

BN_EPS = 1e-5
LANE = 128       # channel axis padded to a multiple of the TPU lane width
SUBLANE = 8


def _round_up(v, m):
    return ((v + m - 1) // m) * m


def _row_mask(start_row, nrows, seq_len):
    """(nrows, 1) bool mask:  0 <= start_row + r < seq_len."""
    r = start_row + jax.lax.broadcasted_iota(jnp.int32, (nrows, 1), 0)
    return jnp.logical_and(r >= 0, r < seq_len)


def _conv3_taps(src, w_ref, nrows):
    """3-tap 'valid' conv over a (B, nrows+2, C) window as 3 accumulated MXU
    matmuls with the batch dim collapsed into M.  Returns (B, nrows, Co) f32."""
    b = src.shape[0]
    c = src.shape[-1]
    co = w_ref.shape[-1]
    acc = jnp.dot(src[:, 0:nrows, :].reshape(b * nrows, c), w_ref[0],
                  preferred_element_type=jnp.float32)
    acc += jnp.dot(src[:, 1:nrows + 1, :].reshape(b * nrows, c), w_ref[1],
                   preferred_element_type=jnp.float32)
    acc += jnp.dot(src[:, 2:nrows + 2, :].reshape(b * nrows, c), w_ref[2],
                   preferred_element_type=jnp.float32)
    return acc.reshape(b, nrows, co)


def _store_stats(stat_ref, v):
    """Per-tile partial BN stats (sum, sum-of-squares) as two direct row
    stores; rows 2..7 of the stat block are unused."""
    b, r, c = v.shape
    v2 = v.astype(jnp.float32).reshape(b * r, c)
    stat_ref[0, 0:1, :] = jnp.sum(v2, axis=0, keepdims=True)
    stat_ref[0, 1:2, :] = jnp.sum(v2 * v2, axis=0, keepdims=True)


# --------------------------------------------------------------------------
# Pass 1: conv1 (3-tap, padding=1) + per-tile partial BN1 statistics.
# --------------------------------------------------------------------------
def _conv1_kernel(xm_ref, xh_ref, w1_ref, ypre_ref, stat_ref, *,
                  block_l, seq_len, l_total):
    i = pl.program_id(0)
    tl = block_l

    # Window rows: global [i*tl - 1, i*tl + tl + 1).  Halo rows come from a
    # small pipelined (nt, B, 2, Ci) array built in the wrapper; invalid halo
    # rows are already zero there (conv zero padding), so no masking needed.
    xw = jnp.concatenate(
        [xh_ref[0, :, 0:1, :], xm_ref[...], xh_ref[0, :, 1:2, :]], axis=1)
    y = _conv3_taps(xw, w1_ref, tl)                       # (B, tl, Co) f32

    if l_total != seq_len:            # static: only emitted when L was padded
        y = jnp.where(_row_mask(i * tl, tl, seq_len)[None], y, 0.0)

    yq = y.astype(ypre_ref.dtype)
    ypre_ref[...] = yq
    _store_stats(stat_ref, yq)        # stats consistent with stored precision


# --------------------------------------------------------------------------
# Pass 2: BN1 (fused scale/shift) + ReLU, conv2a, conv2b + partial BN2 stats.
# --------------------------------------------------------------------------
def _resblock_kernel(ym_ref, yh_ref, w2a_ref, w2b_ref, sc1_ref, sh1_ref,
                     z_ref, stat_ref, *, block_l, seq_len, l_total):
    i = pl.program_id(0)
    tl = block_l
    cdt = ym_ref.dtype
    sc1 = sc1_ref[...]
    sh1 = sh1_ref[...]

    def bn1_relu(v):
        return jnp.maximum(v.astype(jnp.float32) * sc1 + sh1, 0.0)

    # Halo rows (global i*tl-2, i*tl-1, i*tl+tl, i*tl+tl+1).  Rows outside
    # [0, L) must be *zero* conv inputs (not relu(shift)), so mask post-BN.
    yh = bn1_relu(yh_ref[0])                                       # (B, 4, Co)
    yl = jnp.where(_row_mask(i * tl - 2, 2, seq_len)[None], yh[:, 0:2, :], 0.0)
    yr = jnp.where(_row_mask(i * tl + tl, 2, seq_len)[None], yh[:, 2:4, :], 0.0)

    ym = bn1_relu(ym_ref[...])                                     # (B, tl, Co)
    if l_total != seq_len:
        ym = jnp.where(_row_mask(i * tl, tl, seq_len)[None], ym, 0.0)

    yw = jnp.concatenate(
        [yl.astype(cdt), ym.astype(cdt), yr.astype(cdt)], axis=1)  # (B, tl+4, Co)

    # conv2a over global rows [i*tl-1, i*tl+tl+1); its out-of-range rows are
    # the zero padding conv2b must see.
    za = _conv3_taps(yw, w2a_ref, tl + 2)
    za = jnp.where(_row_mask(i * tl - 1, tl + 2, seq_len)[None], za, 0.0)

    z = _conv3_taps(za.astype(cdt), w2b_ref, tl)                   # (B, tl, Co)
    if l_total != seq_len:
        z = jnp.where(_row_mask(i * tl, tl, seq_len)[None], z, 0.0)

    zq = z.astype(z_ref.dtype)
    z_ref[...] = zq
    _store_stats(stat_ref, zq)


# --------------------------------------------------------------------------
# Pass 3: BN2 (scale/shift) + residual add + ReLU (elementwise, pipelined).
# --------------------------------------------------------------------------
def _output_kernel(ypre_ref, z_ref, sc1_ref, sh1_ref, sc2_ref, sh2_ref,
                   o_ref, *, block_l, seq_len, l_total):
    y = jnp.maximum(ypre_ref[...].astype(jnp.float32) * sc1_ref[...]
                    + sh1_ref[...], 0.0)                    # residual branch
    z = z_ref[...].astype(jnp.float32) * sc2_ref[...] + sh2_ref[...]
    out = jnp.maximum(z + y, 0.0)
    if l_total != seq_len:                                  # keep pad rows zero
        out = jnp.where(_row_mask(pl.program_id(0) * block_l, block_l,
                                  seq_len)[None], out, 0.0)
    o_ref[...] = out.astype(o_ref.dtype)


# --------------------------------------------------------------------------
# Projection head of PPGPretrainModel: Linear -> ReLU -> Linear (fused).
# --------------------------------------------------------------------------
def _projection_kernel(x_ref, w1_ref, b1_ref, w2_ref, b2_ref, o_ref):
    h = jnp.dot(x_ref[...], w1_ref[...],
                preferred_element_type=jnp.float32) + b1_ref[...]
    h = jnp.maximum(h, 0.0).astype(w2_ref.dtype)
    o = jnp.dot(h, w2_ref[...], preferred_element_type=jnp.float32) + b2_ref[...]
    o_ref[...] = o.astype(o_ref.dtype)


# ------------------------------ JAX glue ------------------------------------
def upsample_linear_2x(x):
    """nn.Upsample(scale_factor=2, mode='linear', align_corners=False).
    Closed-form 2x blend (no gathers).  x: (B, C, L) -> (B, C, 2L)."""
    x_prev = jnp.concatenate([x[..., :1], x[..., :-1]], axis=-1)
    x_next = jnp.concatenate([x[..., 1:], x[..., -1:]], axis=-1)
    even = 0.75 * x + 0.25 * x_prev
    odd = 0.75 * x + 0.25 * x_next
    out = jnp.stack([even, odd], axis=-1)
    return out.reshape(x.shape[:-1] + (2 * x.shape[-1],))


def _build_halo(a, tl, nt, h):
    """Per-tile edge-row halos from a (B, nt*tl, C) array WITHOUT a full-array
    pad/copy.  Returns (nt, B, 2h, C): [:, :, :h] = rows [i*tl-h, i*tl),
    [:, :, h:] = rows [(i+1)*tl, (i+1)*tl + h), zeros outside the array."""
    b, _, c = a.shape
    tiles = a.reshape(b, nt, tl, c)
    first = tiles[:, :, :h, :]
    last = tiles[:, :, tl - h:, :]
    zero = jnp.zeros((b, 1, h, c), a.dtype)
    left = jnp.concatenate([zero, last[:, :nt - 1]], axis=1)
    right = jnp.concatenate([first[:, 1:], zero], axis=1)
    return jnp.transpose(jnp.concatenate([left, right], axis=2), (1, 0, 2, 3))


def _pad_w(w, cin_p, cout_p, dtype):
    k, cin, cout = w.shape
    return jnp.zeros((k, cin_p, cout_p), dtype).at[:, :cin, :cout].set(
        w.astype(dtype))


def _pad_vec(v, c_p):
    return jnp.zeros((1, c_p), jnp.float32).at[0, :v.shape[-1]].set(
        v.reshape(-1).astype(jnp.float32))


def _bn_scale_shift(stats, gamma_p, beta_p, count):
    """Reduce per-tile partial sums -> fused per-channel scale/shift."""
    ssum = jnp.sum(stats[:, 0, :], axis=0)
    ssq = jnp.sum(stats[:, 1, :], axis=0)
    mean = ssum / count
    var = jnp.maximum(ssq / count - mean * mean, 0.0)    # biased (training BN)
    scale = gamma_p[0] * jax.lax.rsqrt(var + BN_EPS)
    shift = beta_p[0] - mean * scale
    return scale.reshape(1, -1), shift.reshape(1, -1)


def _tpu_vmem_bytes():
    try:
        return int(pltpu.get_tpu_info().vmem_capacity_bytes)
    except Exception:                 # query unavailable -> conservative default
        return 64 * 1024 * 1024


def convert_torch_conv1d_weight(w_torch):
    """PyTorch Conv1d weight (Cout, Cin, k) -> kernel layout (k, Cin, Cout)."""
    return jnp.transpose(w_torch, (2, 1, 0))


def upblock_forward(x, skip, params, *, block_l=256, act_dtype=jnp.bfloat16,
                    out_dtype=None):
    """x: (B, in_ch, L0), skip: (B, in_ch, L) -> (B, out_ch, L).

    act_dtype: storage + MXU-input dtype of activations between passes
    (bfloat16 in production; accumulation / BN math stays float32)."""
    out_dtype = act_dtype if out_dtype is None else out_dtype

    # ---- wrapper-level prep (upsample + concat + layout) --------------------
    xu = upsample_linear_2x(x)
    L = skip.shape[-1]
    if xu.shape[-1] != L:                          # F.pad(..., (0, diff))
        xu = jnp.pad(xu, ((0, 0), (0, 0), (0, L - xu.shape[-1])))
    xcat = jnp.concatenate([xu, skip], axis=1)     # (B, 2*in_ch, L)   NCL
    xcat = jnp.transpose(xcat, (0, 2, 1))          # (B, L, 2*in_ch)   BLC
    # TODO(synk): keep the whole encoder in BLC and fuse the 2x upsample +
    # channel concat into pass 1 (split W1 along Cin) to remove these
    # wrapper-level HBM passes as well.

    B = xcat.shape[0]
    ci = xcat.shape[-1]
    co = params['w1'].shape[-1]
    ci_p = _round_up(ci, LANE)                     # lane-dense channels
    co_p = _round_up(co, LANE)

    # ---- tiling: generation-aware tile size, >= 2 tiles for 2-TC chips ------
    vmem_cap = _tpu_vmem_bytes()
    if vmem_cap <= 80 * 1024 * 1024:               # 64-MiB/TC parts (v7x)
        block_l = min(block_l, 128)
    tl = _round_up(min(block_l, L), SUBLANE)
    if L > SUBLANE and pl.cdiv(L, tl) < 2:
        tl = _round_up(pl.cdiv(L, 2), SUBLANE)     # keep both TCs busy on v7x
    nt = pl.cdiv(L, tl)
    l_tot = nt * tl

    xmain = jnp.pad(xcat, ((0, 0), (0, l_tot - L), (0, ci_p - ci))
                    ).astype(act_dtype)            # (B, l_tot, ci_p)
    xhalo = _build_halo(xmain, tl, nt, 1)          # (nt, B, 2, ci_p)

    w1s = _pad_w(params['w1'], ci_p, co_p, act_dtype)
    w2as = _pad_w(params['w2a'], co_p, co_p, act_dtype)
    w2bs = _pad_w(params['w2b'], co_p, co_p, act_dtype)
    g1, b1 = _pad_vec(params['g1'], co_p), _pad_vec(params['b1'], co_p)
    g2, b2 = _pad_vec(params['g2'], co_p), _pad_vec(params['b2'], co_p)

    in_blk = pl.BlockSpec((B, tl, ci_p), lambda i: (0, i, 0))
    act_blk = pl.BlockSpec((B, tl, co_p), lambda i: (0, i, 0))
    xhalo_blk = pl.BlockSpec((1, B, 2, ci_p), lambda i: (i, 0, 0, 0))
    yhalo_blk = pl.BlockSpec((1, B, 4, co_p), lambda i: (i, 0, 0, 0))
    stat_blk = pl.BlockSpec((1, SUBLANE, co_p), lambda i: (i, 0, 0))
    w1_blk = pl.BlockSpec((3, ci_p, co_p), lambda i: (0, 0, 0))
    w2_blk = pl.BlockSpec((3, co_p, co_p), lambda i: (0, 0, 0))
    vec_blk = pl.BlockSpec((1, co_p), lambda i: (0, 0))

    cparams = pltpu.CompilerParams(
        dimension_semantics=("parallel",),          # tiles are independent
        vmem_limit_bytes=min(vmem_cap * 3 // 4, 96 * 1024 * 1024))
    static = dict(block_l=tl, seq_len=L, l_total=l_tot)

    # ---- pass 1: conv1 + BN1 partial stats ----------------------------------
    ypre, stats1 = pl.pallas_call(
        functools.partial(_conv1_kernel, **static),
        grid=(nt,),
        in_specs=[in_blk, xhalo_blk, w1_blk],
        out_specs=[act_blk, stat_blk],
        out_shape=[jax.ShapeDtypeStruct((B, l_tot, co_p), act_dtype),
                   jax.ShapeDtypeStruct((nt, SUBLANE, co_p), jnp.float32)],
        compiler_params=cparams,
    )(xmain, xhalo, w1s)
    scale1, shift1 = _bn_scale_shift(stats1, g1, b1, B * L)

    # ---- pass 2: BN1+ReLU, conv2a, conv2b + BN2 partial stats ---------------
    yhalo = _build_halo(ypre, tl, nt, 2)           # edge rows only, no full pad
    z, stats2 = pl.pallas_call(
        functools.partial(_resblock_kernel, **static),
        grid=(nt,),
        in_specs=[act_blk, yhalo_blk, w2_blk, w2_blk, vec_blk, vec_blk],
        out_specs=[act_blk, stat_blk],
        out_shape=[jax.ShapeDtypeStruct((B, l_tot, co_p), act_dtype),
                   jax.ShapeDtypeStruct((nt, SUBLANE, co_p), jnp.float32)],
        compiler_params=cparams,
    )(ypre, yhalo, w2as, w2bs, scale1, shift1)
    scale2, shift2 = _bn_scale_shift(stats2, g2, b2, B * L)

    # ---- pass 3: BN2 + residual + ReLU --------------------------------------
    out = pl.pallas_call(
        functools.partial(_output_kernel, **static),
        grid=(nt,),
        in_specs=[act_blk, act_blk, vec_blk, vec_blk, vec_blk, vec_blk],
        out_specs=act_blk,
        out_shape=jax.ShapeDtypeStruct((B, l_tot, co_p), out_dtype),
        compiler_params=cparams,
    )(ypre, z, scale1, shift1, scale2, shift2)

    # strip L/channel padding, back to NCL
    return jnp.transpose(out[:, :L, :co], (0, 2, 1))


def projection_head_forward(features, pparams, *, block_b=128,
                            act_dtype=jnp.bfloat16, out_dtype=jnp.float32):
    """nn.Sequential(Linear(F, P), ReLU, Linear(P, P)) of PPGPretrainModel.
    Linear weights stored (in, out); transpose PyTorch's (out, in) to load."""
    B, F = features.shape
    P = pparams['w1'].shape[-1]
    f_p, p_p = _round_up(F, LANE), _round_up(P, LANE)
    b_p = _round_up(B, SUBLANE)
    bt = min(_round_up(block_b, SUBLANE), b_p)
    nb = pl.cdiv(b_p, bt)
    b_tot = nb * bt

    xq = jnp.pad(features, ((0, b_tot - B), (0, f_p - F))).astype(act_dtype)
    w1 = jnp.zeros((f_p, p_p), act_dtype).at[:F, :P].set(
        pparams['w1'].astype(act_dtype))
    w2 = jnp.zeros((p_p, p_p), act_dtype).at[:P, :P].set(
        pparams['w2'].astype(act_dtype))
    b1 = _pad_vec(pparams['b1'], p_p)
    b2 = _pad_vec(pparams['b2'], p_p)

    out = pl.pallas_call(
        _projection_kernel,
        grid=(nb,),
        in_specs=[pl.BlockSpec((bt, f_p), lambda i: (i, 0)),
                  pl.BlockSpec((f_p, p_p), lambda i: (0, 0)),
                  pl.BlockSpec((1, p_p), lambda i: (0, 0)),
                  pl.BlockSpec((p_p, p_p), lambda i: (0, 0)),
                  pl.BlockSpec((1, p_p), lambda i: (0, 0))],
        out_specs=pl.BlockSpec((bt, p_p), lambda i: (i, 0)),
        out_shape=jax.ShapeDtypeStruct((b_tot, p_p), out_dtype),
        compiler_params=pltpu.CompilerParams(
            dimension_semantics=("parallel",)),
    )(xq, w1, b1, w2, b2)
    return out[:B, :P]


def ppg_pretrain_forward(encoder_features, proj_params, **kw):
    """PPGPretrainModel.forward: returns (features, projection_head(features)).
    The base_encoder is injected/unspecified in the spec; its UpBlock stage is
    implemented above (`upblock_forward`)."""
    return encoder_features, projection_head_forward(encoder_features,
                                                     proj_params, **kw)


# Pure-JAX references (same forward math, no Pallas, no padding).
def upblock_reference(x, skip, params):
    xu = upsample_linear_2x(x)
    L = skip.shape[-1]
    if xu.shape[-1] != L:
        xu = jnp.pad(xu, ((0, 0), (0, 0), (0, L - xu.shape[-1])))
    xc = jnp.transpose(jnp.concatenate([xu, skip], axis=1), (0, 2, 1))

    def conv3(inp, w):
        xp = jnp.pad(inp, ((0, 0), (1, 1), (0, 0)))
        return sum(jnp.einsum('blc,cd->bld', xp[:, k:k + L, :], w[k])
                   for k in range(3))

    def bn(y, g, b):
        m = jnp.mean(y, axis=(0, 1), keepdims=True)
        v = jnp.mean((y - m) ** 2, axis=(0, 1), keepdims=True)
        return (y - m) / jnp.sqrt(v + BN_EPS) * g + b

    y = jnp.maximum(bn(conv3(xc, params['w1']), params['g1'], params['b1']),
                    0.0)
    r = y
    z = conv3(conv3(y, params['w2a']), params['w2b'])
    z = bn(z, params['g2'], params['b2']) + r
    return jnp.transpose(jnp.maximum(z, 0.0), (0, 2, 1))


def projection_reference(features, pparams):
    h = jnp.maximum(features @ pparams['w1'] + pparams['b1'], 0.0)
    return h @ pparams['w2'] + pparams['b2']


def init_params(key, in_ch, out_ch):
    k1, k2, k3, k4, k5, k6, k7 = jax.random.split(key, 7)
    c_in = 2 * in_ch
    s1 = 1.0 / jnp.sqrt(3.0 * c_in)
    s2 = 1.0 / jnp.sqrt(3.0 * out_ch)
    return {
        'w1': jax.random.normal(k1, (3, c_in, out_ch), jnp.float32) * s1,
        'g1': 0.5 + jax.random.uniform(k4, (out_ch,), jnp.float32),
        'b1': 0.1 * jax.random.normal(k5, (out_ch,), jnp.float32),
        'w2a': jax.random.normal(k2, (3, out_ch, out_ch), jnp.float32) * s2,
        'w2b': jax.random.normal(k3, (3, out_ch, out_ch), jnp.float32) * s2,
        'g2': 0.5 + jax.random.uniform(k6, (out_ch,), jnp.float32),
        'b2': 0.1 * jax.random.normal(k7, (out_ch,), jnp.float32),
    }


def init_proj_params(key, feat_dim, proj_dim=128):
    k1, k2, k3, k4 = jax.random.split(key, 4)
    s1 = 1.0 / jnp.sqrt(float(feat_dim))
    s2 = 1.0 / jnp.sqrt(float(proj_dim))
    return {
        'w1': jax.random.normal(k1, (feat_dim, proj_dim), jnp.float32) * s1,
        'b1': 0.1 * jax.random.normal(k2, (proj_dim,), jnp.float32),
        'w2': jax.random.normal(k3, (proj_dim, proj_dim), jnp.float32) * s2,
        'b2': 0.1 * jax.random.normal(k4, (proj_dim,), jnp.float32),
    }


if __name__ == "__main__":
    key = jax.random.PRNGKey(0)
    k_x, k_s, k_p, k_f, k_q = jax.random.split(key, 5)

    # --- encoder UpBlock ------------------------------------------------------
    B, in_ch, out_ch = 2, 4, 8
    L_in = 40                    # skip length 80 -> 3 tiles of 32 rows + masking
    x = jax.random.normal(k_x, (B, in_ch, L_in), jnp.float32)
    skip = jax.random.normal(k_s, (B, in_ch, 2 * L_in), jnp.float32)
    params = init_params(k_p, in_ch, out_ch)
    ref = upblock_reference(x, skip, params)

    out = upblock_forward(x, skip, params, block_l=32,
                          act_dtype=jnp.float32, out_dtype=jnp.float32)
    out = jax.block_until_ready(out)
    assert out.shape == (B, out_ch, 2 * L_in), out.shape
    err = float(jnp.max(jnp.abs(out - ref)))
    assert err < 1e-3, "f32 max |diff| = %e" % err

    out_bf = upblock_forward(x, skip, params, block_l=32)   # bf16 production path
    out_bf = jax.block_until_ready(out_bf)
    err_bf = float(jnp.max(jnp.abs(out_bf.astype(jnp.float32) - ref)))
    assert err_bf < 0.5, "bf16 max |diff| = %e" % err_bf

    # --- projection head ------------------------------------------------------
    feat_dim, proj_dim = 32, 128
    features = jax.random.normal(k_f, (B, feat_dim), jnp.float32)
    pparams = init_proj_params(k_q, feat_dim, proj_dim)
    feats_out, projected = ppg_pretrain_forward(features, pparams,
                                                act_dtype=jnp.float32)
    projected = jax.block_until_ready(projected)
    pref = projection_reference(features, pparams)
    assert projected.shape == (B, proj_dim), projected.shape
    perr = float(jnp.max(jnp.abs(projected - pref)))
    assert perr < 1e-3, "proj max |diff| = %e" % perr
    assert feats_out.shape == features.shape

    print("KERNEL_OK")
</pallas_src>

<mosaic_0001>
module attributes {stable_mosaic.version = 11 : i64} {
  func.func @_conv1_kernel(%arg0: i32, %arg1: memref<2x32x128xf32, #tpu.memory_space<vmem>>, %arg2: memref<1x2x2x128xf32, #tpu.memory_space<vmem>>, %arg3: memref<3x128x128xf32, #tpu.memory_space<vmem>>, %arg4: memref<2x32x128xf32, #tpu.memory_space<vmem>>, %arg5: memref<1x8x128xf32, #tpu.memory_space<vmem>>) attributes {dimension_semantics = [#tpu.dimension_semantics<parallel>], iteration_bounds = array<i64: 3>, scalar_prefetch = 0 : i64, scratch_operands = 0 : i64, tpu.core_type = #tpu.core_type<tc>, window_params = [{transform_indices = @transform_0, window_bounds = array<i64: 2, 32, 128>}, {transform_indices = @transform_1, window_bounds = array<i64: 1, 2, 2, 128>}, {pipeline_mode = #tpu.pipeline_mode<synchronous>, transform_indices = @transform_2, window_bounds = array<i64: 3, 128, 128>}, {transform_indices = @transform_3, window_bounds = array<i64: 2, 32, 128>}, {transform_indices = @transform_4, window_bounds = array<i64: 1, 8, 128>}]} {
    %c0 = arith.constant 0 : index
    %c0_0 = arith.constant 0 : index
    %c0_1 = arith.constant 0 : index
    %c0_2 = arith.constant 0 : index
    %0 = vector.load %arg2[%c0, %c0_0, %c0_1, %c0_2] : memref<1x2x2x128xf32, #tpu.memory_space<vmem>>, vector<1x2x1x128xf32>
    %1 = vector.shape_cast %0 : vector<1x2x1x128xf32> to vector<2x1x128xf32>
    %c0_3 = arith.constant 0 : index
    %c0_4 = arith.constant 0 : index
    %c0_5 = arith.constant 0 : index
    %2 = vector.load %arg1[%c0_3, %c0_4, %c0_5] : memref<2x32x128xf32, #tpu.memory_space<vmem>>, vector<2x32x128xf32>
    %c0_6 = arith.constant 0 : index
    %c0_7 = arith.constant 0 : index
    %c1 = arith.constant 1 : index
    %c0_8 = arith.constant 0 : index
    %3 = vector.load %arg2[%c0_6, %c0_7, %c1, %c0_8] : memref<1x2x2x128xf32, #tpu.memory_space<vmem>>, vector<1x2x1x128xf32>
    %4 = vector.shape_cast %3 : vector<1x2x1x128xf32> to vector<2x1x128xf32>
    %5 = tpu.concatenate %1, %2, %4 in 1 : vector<2x1x128xf32>, vector<2x32x128xf32>, vector<2x1x128xf32> -> vector<2x34x128xf32>
    %6 = vector.extract_strided_slice %5 {offsets = [0, 0, 0], sizes = [2, 32, 128], strides = [1, 1, 1]} : vector<2x34x128xf32> to vector<2x32x128xf32>
    %7 = vector.shape_cast %6 : vector<2x32x128xf32> to vector<64x128xf32>
    %c0_9 = arith.constant 0 : index
    %c0_10 = arith.constant 0 : index
    %c0_11 = arith.constant 0 : index
    %8 = vector.load %arg3[%c0_9, %c0_10, %c0_11] : memref<3x128x128xf32, #tpu.memory_space<vmem>>, vector<1x128x128xf32>
    %9 = vector.shape_cast %8 : vector<1x128x128xf32> to vector<128x128xf32>
    %cst = arith.constant dense<0.000000e+00> : vector<64x128xf32>
    %10 = tpu.matmul %7, %9, %cst {dimension_numbers = #tpu.dot_dimension_numbers<[1], [0], [0], [1], [0, 0, 1, 1], [], []>} : vector<64x128xf32>, vector<128x128xf32>, vector<64x128xf32> -> vector<64x128xf32>
    %11 = vector.extract_strided_slice %5 {offsets = [0, 1, 0], sizes = [2, 32, 128], strides = [1, 1, 1]} : vector<2x34x128xf32> to vector<2x32x128xf32>
    %12 = vector.shape_cast %11 : vector<2x32x128xf32> to vector<64x128xf32>
    %c1_12 = arith.constant 1 : index
    %c0_13 = arith.constant 0 : index
    %c0_14 = arith.constant 0 : index
    %13 = vector.load %arg3[%c1_12, %c0_13, %c0_14] : memref<3x128x128xf32, #tpu.memory_space<vmem>>, vector<1x128x128xf32>
    %14 = vector.shape_cast %13 : vector<1x128x128xf32> to vector<128x128xf32>
    %cst_15 = arith.constant dense<0.000000e+00> : vector<64x128xf32>
    %15 = tpu.matmul %12, %14, %cst_15 {dimension_numbers = #tpu.dot_dimension_numbers<[1], [0], [0], [1], [0, 0, 1, 1], [], []>} : vector<64x128xf32>, vector<128x128xf32>, vector<64x128xf32> -> vector<64x128xf32>
    %16 = arith.addf %10, %15 : vector<64x128xf32>
    %17 = vector.extract_strided_slice %5 {offsets = [0, 2, 0], sizes = [2, 32, 128], strides = [1, 1, 1]} : vector<2x34x128xf32> to vector<2x32x128xf32>
    %18 = vector.shape_cast %17 : vector<2x32x128xf32> to vector<64x128xf32>
    %c2 = arith.constant 2 : index
    %c0_16 = arith.constant 0 : index
    %c0_17 = arith.constant 0 : index
    %19 = vector.load %arg3[%c2, %c0_16, %c0_17] : memref<3x128x128xf32, #tpu.memory_space<vmem>>, vector<1x128x128xf32>
    %20 = vector.shape_cast %19 : vector<1x128x128xf32> to vector<128x128xf32>
    %cst_18 = arith.constant dense<0.000000e+00> : vector<64x128xf32>
    %21 = tpu.matmul %18, %20, %cst_18 {dimension_numbers = #tpu.dot_dimension_numbers<[1], [0], [0], [1], [0, 0, 1, 1], [], []>} : vector<64x128xf32>, vector<128x128xf32>, vector<64x128xf32> -> vector<64x128xf32>
    %22 = arith.addf %16, %21 : vector<64x128xf32>
    %23 = vector.shape_cast %22 : vector<64x128xf32> to vector<2x32x128xf32>
    %c32_i32 = arith.constant 32 : i32
    %24 = arith.muli %arg0, %c32_i32 : i32
    %25 = tpu.iota {dimensions = array<i32: 0>} : vector<32x1xi32>
    %26 = vector.broadcast %24 : i32 to vector<32x1xi32>
    %27 = arith.addi %26, %25 : vector<32x1xi32>
    %c0_i32 = arith.constant 0 : i32
    %28 = vector.broadcast %c0_i32 : i32 to vector<32x1xi32>
    %29 = arith.cmpi sge, %27, %28 : vector<32x1xi32>
    %c80_i32 = arith.constant 80 : i32
    %30 = vector.broadcast %c80_i32 : i32 to vector<32x1xi32>
    %31 = arith.cmpi slt, %27, %30 : vector<32x1xi32>
    %32 = arith.andi %29, %31 : vector<32x1xi1>
    %33 = vector.shape_cast %32 : vector<32x1xi1> to vector<1x32x1xi1>
    %cst_19 = arith.constant 0.000000e+00 : f32
    %34 = vector.shape_cast %33 : vector<1x32x1xi1> to vector<1x32x1xi1>
    %35 = vector.broadcast %34 : vector<1x32x1xi1> to vector<2x32x128xi1>
    %36 = vector.broadcast %cst_19 : f32 to vector<2x32x128xf32>
    %37 = arith.select %35, %23, %36 : vector<2x32x128xi1>, vector<2x32x128xf32>
    %c0_20 = arith.constant 0 : index
    %c0_21 = arith.constant 0 : index
    %c0_22 = arith.constant 0 : index
    %38 = vector.load %arg4[%c0_20, %c0_21, %c0_22] : memref<2x32x128xf32, #tpu.memory_space<vmem>>, vector<2x32x128xf32>
    tpu.vector_store %arg4[%c0_20, %c0_21, %c0_22], %37 {strides = array<i32>} : memref<2x32x128xf32, #tpu.memory_space<vmem>>, vector<2x32x128xf32>,
    %39 = vector.shape_cast %37 : vector<2x32x128xf32> to vector<64x128xf32>
    %cst_23 = arith.constant dense<0.000000e+00> : vector<128xf32>
    %40 = vector.multi_reduction <add>, %39, %cst_23 [0] : vector<64x128xf32> to vector<128xf32>
    %41 = vector.shape_cast %40 : vector<128xf32> to vector<1x128xf32>
    %c0_24 = arith.constant 0 : index
    %c0_25 = arith.constant 0 : index
    %c0_26 = arith.constant 0 : index
    %42 = vector.load %arg5[%c0_24, %c0_25, %c0_26] : memref<1x8x128xf32, #tpu.memory_space<vmem>>, vector<1x1x128xf32>
    %43 = vector.shape_cast %42 : vector<1x1x128xf32> to vector<1x128xf32>
    %44 = vector.shape_cast %41 : vector<1x128xf32> to vector<1x1x128xf32>
    tpu.vector_store %arg5[%c0_24, %c0_25, %c0_26], %44 {strides = array<i32>} : memref<1x8x128xf32, #tpu.memory_space<vmem>>, vector<1x1x128xf32>,
    %45 = arith.mulf %39, %39 : vector<64x128xf32>
    %cst_27 = arith.constant dense<0.000000e+00> : vector<128xf32>
    %46 = vector.multi_reduction <add>, %45, %cst_27 [0] : vector<64x128xf32> to vector<128xf32>
    %47 = vector.shape_cast %46 : vector<128xf32> to vector<1x128xf32>
    %c0_28 = arith.constant 0 : index
    %c1_29 = arith.constant 1 : index
    %c0_30 = arith.constant 0 : index
    %48 = vector.load %arg5[%c0_28, %c1_29, %c0_30] : memref<1x8x128xf32, #tpu.memory_space<vmem>>, vector<1x1x128xf32>
    %49 = vector.shape_cast %48 : vector<1x1x128xf32> to vector<1x128xf32>
    %50 = vector.shape_cast %47 : vector<1x128xf32> to vector<1x1x128xf32>
    tpu.vector_store %arg5[%c0_28, %c1_29, %c0_30], %50 {strides = array<i32>} : memref<1x8x128xf32, #tpu.memory_space<vmem>>, vector<1x1x128xf32>,
    return
  }
  func.func @transform_0(%arg0: i32) -> (i32, i32, i32) {
    %c0_i32 = arith.constant 0 : i32
    %c0_i32_0 = arith.constant 0 : i32
    %c0_i32_1 = arith.constant 0 : i32
    return %c0_i32, %arg0, %c0_i32_0 : i32, i32, i32
  }
  func.func @transform_1(%arg0: i32) -> (i32, i32, i32, i32) {
    %c0_i32 = arith.constant 0 : i32
    %c0_i32_0 = arith.constant 0 : i32
    %c0_i32_1 = arith.constant 0 : i32
    %c0_i32_2 = arith.constant 0 : i32
    return %arg0, %c0_i32, %c0_i32_0, %c0_i32_1 : i32, i32, i32, i32
  }
  func.func @transform_2(%arg0: i32) -> (i32, i32, i32) {
    %c0_i32 = arith.constant 0 : i32
    %c0_i32_0 = arith.constant 0 : i32
    %c0_i32_1 = arith.constant 0 : i32
    %c0_i32_2 = arith.constant 0 : i32
    return %c0_i32, %c0_i32_0, %c0_i32_1 : i32, i32, i32
  }
  func.func @transform_3(%arg0: i32) -> (i32, i32, i32) {
    %c0_i32 = arith.constant 0 : i32
    %c0_i32_0 = arith.constant 0 : i32
    %c0_i32_1 = arith.constant 0 : i32
    return %c0_i32, %arg0, %c0_i32_0 : i32, i32, i32
  }
  func.func @transform_4(%arg0: i32) -> (i32, i32, i32) {
    %c0_i32 = arith.constant 0 : i32
    %c0_i32_0 = arith.constant 0 : i32
    %c0_i32_1 = arith.constant 0 : i32
    return %arg0, %c0_i32, %c0_i32_0 : i32, i32, i32
  }
}

</mosaic_0001>

<llo_original>
// kernel: tpu_custom_call.1
$region0: #{tpu_custom_call.1}
  #allocation0 [shape = 'u32[]', space=smem, size = 0x4, offset = 0x4, fixed_abs, tag = 'smem constant byte address 0x4 - core index']
  #allocation1 [shape = 'u32[72,128]{1,0:T(1,128)}', space=vmem, size = 0x9000, scoped, tag = 'internal scratch']
  #allocation11 [shape = 's32[]', space=sflag, size = 0x4, offset = 0, fixed_abs, tag = 'sflag constant byte address 0x0 - dummy sync flag']
  #allocation13 [shape = 's32[]', space=sflag, size = 0x4, offset = 0, fixed_abs, tag = 'sflag constant byte address 0x0 - dummy sync flag']
  %s0 = inlined_call_operand.hbm [shape: f32[2,96,128], index: 0, kind: input, shape index: {}]
  %s1 = inlined_call_operand.hbm [shape: f32[3,2,2,128], index: 1, kind: input, shape index: {}]
  %s2 = inlined_call_operand.hbm [shape: f32[3,128,128], index: 2, kind: input, shape index: {}]
  %s3 = inlined_call_operand.hbm [shape: f32[2,96,128], index: 3, kind: output, shape index: {0}]
  %s4 = inlined_call_operand.hbm [shape: f32[3,8,128], index: 4, kind: output, shape index: {1}]
  %5 = xla_tuple %s3, %s4
  %s6 = sld [smem:[#allocation0]]
  $region65: #{tpu_custom_call.1} parent=0
    _
  %s8 = ssub.s32 1, %s6
  %s9 = scalar_select 0, %s8, %s6
  $region1: #{tpu_custom_call.1} parent=0
    #allocation2 [shape = 'u8[65536]{0}', space=vmem, size = 0x10000, scoped, tag = 'input window, operand 0']
    #allocation3 [shape = 's32[2]{0}', space=sflag, size = 0x8, scoped, tag = 'scoped memory for tpu_custom_call.1']
    #allocation4 [shape = 's32[2]{0}', space=sflag, size = 0x8, scoped, tag = 'scoped memory for tpu_custom_call.1']
    #allocation5 [shape = 'u8[4096]{0}', space=vmem, size = 0x1000, scoped, tag = 'input window, operand 1']
    #allocation6 [shape = 's32[2]{0}', space=sflag, size = 0x8, scoped, tag = 'scoped memory for tpu_custom_call.1']
    #allocation7 [shape = 'u8[196608]{0}', space=vmem, size = 0x30000, scoped, tag = 'input window, operand 2, single buffered']
    #allocation8 [shape = 'u8[65536]{0}', space=vmem, size = 0x10000, scoped, tag = 'output window, operand 0']
    #allocation9 [shape = 'u8[8192]{0}', space=vmem, size = 0x2000, scoped, tag = 'output window, operand 1']
    #allocation10 [shape = 's32[2]{0}', space=sflag, size = 0x8, scoped, tag = 'scoped memory for tpu_custom_call.1']
    %10 = vsyncpa [#allocation3], 0
    %s11 = scalar_lea.sflag [#allocation3], 1
    %12 = vsyncpa %s11, 0
    %13 = vsyncpa [#allocation6], 0
    %s14 = scalar_lea.sflag [#allocation6], 1
    %15 = vsyncpa %s14, 0
    %16 = vsyncpa [#allocation4], 0
    %s17 = scalar_lea.sflag [#allocation4], 1
    %18 = vsyncpa %s17, 0
    %19 = vsyncpa [#allocation10], 0
    %s20 = scalar_lea.sflag [#allocation10], 1
    %21 = vsyncpa %s20, 0
    loop: start=0, step=1, limit=5
    $region2: #{tpu_custom_call.1} parent=1 // loop_pre_header
      _
    $region3: #{tpu_custom_call.1} parent=1 // loop_header
      %s23 = sphi 0, %s27
      %p24 = scmp.ge.s32.totalorder %s23, 5
      %s33 = sphi 0, %s35
      %s36 = sphi 0, %s33
      %s37 = sphi 0, %s36
      %s53 = sphi 0, %s37
      %s59 = sphi 0, %s61
      %s62 = sphi 0, %s59
      %s63 = sphi 0, %s62
      %s79 = sphi 0, %s63
      %s83 = sphi 0, %s83
      %s85 = sphi 0, %s83
      %s86 = sphi 0, %s85
      %s100 = sphi 0, %s86
      %s106 = sphi 0, %s108
      %s109 = sphi 0, %s106
      %s110 = sphi 0, %s109
      %s126 = sphi 0, %s110
      %s132 = sphi 0, %s134
      %s135 = sphi 0, %s132
      %s136 = sphi 0, %s135
      %s152 = sphi 0, %s136
    $region4: #{tpu_custom_call.1} parent=1 // loop_header_branch
      %26 = sbr.rel (%p24) target = $region8
    $region5: #{tpu_custom_call.1} parent=1 // loop_body
      %s28 = ssub.s32 %s23, 1
      %s29 = ssub.s32 %s23, 2
      %s30 = sadd.s32 %s23, 1
      %s31 = ssub.s32 %s23, %s30
      %p32 = scmp.eq.s32.totalorder %s31, 0
      %s34 = sadd.s32 %s33, 1
      %s35 = scalar_select %p32, %s33, %s34
      %p38 = pneg %p32
      %p39 = scmp.eq.s32.totalorder %s23, 2
      %p40 = por %p38, %p39
      %p41 = scmp.ne.s32.totalorder %s33, %s36
      %p42 = scmp.eq.s32.totalorder %s23, 0
      %p43 = por %p41, %p42
      %p44 = scmp.ne.s32.totalorder %s33, %s36
      %p45 = scmp.eq.s32.totalorder %s28, 2
      %p46 = por %p44, %p45
      %p47 = scmp.ne.s32.totalorder %s36, %s37
      %p48 = scmp.eq.s32.totalorder %s28, 0
      %p49 = por %p47, %p48
      %p50 = scmp.ne.s32.totalorder %s36, %s37
      %p51 = scmp.eq.s32.totalorder %s29, 2
      %p52 = por %p50, %p51
      %p54 = scmp.ne.s32.totalorder %s37, %s53
      %p55 = scmp.eq.s32.totalorder %s29, 0
      %p56 = por %p54, %p55
      %s57 = ssub.s32 %s23, %s30
      %p58 = scmp.eq.s32.totalorder %s57, 0
      %s60 = sadd.s32 %s59, 1
      %s61 = scalar_select %p58, %s59, %s60
      %p64 = pneg %p58
      %p65 = scmp.eq.s32.totalorder %s23, 2
      %p66 = por %p64, %p65
      %p67 = scmp.ne.s32.totalorder %s59, %s62
      %p68 = scmp.eq.s32.totalorder %s23, 0
      %p69 = por %p67, %p68
      %p70 = scmp.ne.s32.totalorder %s59, %s62
      %p71 = scmp.eq.s32.totalorder %s28, 2
      %p72 = por %p70, %p71
      %p73 = scmp.ne.s32.totalorder %s62, %s63
      %p74 = scmp.eq.s32.totalorder %s28, 0
      %p75 = por %p73, %p74
      %p76 = scmp.ne.s32.totalorder %s62, %s63
      %p77 = scmp.eq.s32.totalorder %s29, 2
      %p78 = por %p76, %p77
      %p80 = scmp.ne.s32.totalorder %s63, %s79
      %p81 = scmp.eq.s32.totalorder %s29, 0
      %p82 = por %p80, %p81
      %s84 = sadd.s32 %s83, 1
      %p87 = scmp.eq.s32.totalorder %s23, 2
      %p88 = scmp.ne.s32.totalorder %s83, %s85
      %p89 = scmp.eq.s32.totalorder %s23, 0
      %p90 = por %p88, %p89
      %p91 = scmp.ne.s32.totalorder %s83, %s85
      %p92 = scmp.eq.s32.totalorder %s28, 2
      %p93 = por %p91, %p92
      %p94 = scmp.ne.s32.totalorder %s85, %s86
      %p95 = scmp.eq.s32.totalorder %s28, 0
      %p96 = por %p94, %p95
      %p97 = scmp.ne.s32.totalorder %s85, %s86
      %p98 = scmp.eq.s32.totalorder %s29, 2
      %p99 = por %p97, %p98
      %p101 = scmp.ne.s32.totalorder %s86, %s100
      %p102 = scmp.eq.s32.totalorder %s29, 0
      %p103 = por %p101, %p102
      %s104 = ssub.s32 %s23, %s30
      %p105 = scmp.eq.s32.totalorder %s104, 0
      %s107 = sadd.s32 %s106, 1
      %s108 = scalar_select %p105, %s106, %s107
      %p111 = pneg %p105
      %p112 = scmp.eq.s32.totalorder %s23, 2
      %p113 = por %p111, %p112
      %p114 = scmp.ne.s32.totalorder %s106, %s109
      %p115 = scmp.eq.s32.totalorder %s23, 0
      %p116 = por %p114, %p115
      %p117 = scmp.ne.s32.totalorder %s106, %s109
      %p118 = scmp.eq.s32.totalorder %s28, 2
      %p119 = por %p117, %p118
      %p120 = scmp.ne.s32.totalorder %s109, %s110
      %p121 = scmp.eq.s32.totalorder %s28, 0
      %p122 = por %p120, %p121
      %p123 = scmp.ne.s32.totalorder %s109, %s110
      %p124 = scmp.eq.s32.totalorder %s29, 2
      %p125 = por %p123, %p124
      %p127 = scmp.ne.s32.totalorder %s110, %s126
      %p128 = scmp.eq.s32.totalorder %s29, 0
      %p129 = por %p127, %p128
      %s130 = ssub.s32 %s23, %s30
      %p131 = scmp.eq.s32.totalorder %s130, 0
      %s133 = sadd.s32 %s132, 1
      %s134 = scalar_select %p131, %s132, %s133
      %p137 = pneg %p131
      %p138 = scmp.eq.s32.totalorder %s23, 2
      %p139 = por %p137, %p138
      %p140 = scmp.ne.s32.totalorder %s132, %s135
      %p141 = scmp.eq.s32.totalorder %s23, 0
      %p142 = por %p140, %p141
      %p143 = scmp.ne.s32.totalorder %s132, %s135
      %p144 = scmp.eq.s32.totalorder %s28, 2
      %p145 = por %p143, %p144
      %p146 = scmp.ne.s32.totalorder %s135, %s136
      %p147 = scmp.eq.s32.totalorder %s28, 0
      %p148 = por %p146, %p147
      %p149 = scmp.ne.s32.totalorder %s135, %s136
      %p150 = scmp.eq.s32.totalorder %s29, 2
      %p151 = por %p149, %p150
      %p153 = scmp.ne.s32.totalorder %s136, %s152
      %p154 = scmp.eq.s32.totalorder %s29, 0
      %p155 = por %p153, %p154
      %p156 = scmp.le.s32.totalorder 1, %s23
      %p157 = scmp.lt.s32.totalorder %s23, 4
      %p158 = pnand %p156, %p157
      %p159 = pneg %p158
      // Predicated region
      $region9: #{tpu_custom_call.1} parent=5 // pred_check
        _
      $region10: #{tpu_custom_call.1} parent=5 // pred_check_branch
        %161 = sbr.rel (%p158) target = $region12
      $region11: #{tpu_custom_call.1} parent=5 // pred_region
        %s162 = ssub.s32 %s23, 1
        // Predicated region
        $region13: #{tpu_custom_call.1} parent=11 // pred_check
          %p163 = pneg %p96
        $region14: #{tpu_custom_call.1} parent=11 // pred_check_branch
          %165 = sbr.rel (%p163) target = $region16
        $region15: #{tpu_custom_call.1} parent=11 // pred_region
          %167 = vsyncadd [#allocation6], 0
          %s168 = sshll.u32 %s2, 4
          %s169 = int_to_ptr.hbm [resolvable:$true] %s168
          %s170 = sshll.u32 [#allocation7], 4
          %s171 = int_to_ptr.vmem [resolvable:$true] %s170
          %176 = dma.hbm_to_vmem [thread:$0]  %s169, 6144, %s171, [#allocation6], 128, 128, 8
        $region16: #{tpu_custom_call.1} parent=11 // pred_fallthru
          _
      $region12: #{tpu_custom_call.1} parent=5 // pred_fallthru
        _
      %p177 = scmp.lt.s32.totalorder %s23, 3
      // Predicated region
      $region17: #{tpu_custom_call.1} parent=5 // pred_check
        %p178 = pneg %p177
      $region18: #{tpu_custom_call.1} parent=5 // pred_check_branch
        %180 = sbr.rel (%p178) target = $region20
      $region19: #{tpu_custom_call.1} parent=5 // pred_region
        // Predicated region
        $region21: #{tpu_custom_call.1} parent=19 // pred_check
          %p181 = pneg %p43
        $region22: #{tpu_custom_call.1} parent=19 // pred_check_branch
          %183 = sbr.rel (%p181) target = $region24
        $region23: #{tpu_custom_call.1} parent=19 // pred_region
          #allocation12 [shape = 'u32[6]{0}', space=smem, size = 0x18, scoped, tag = 'DMA stride descriptor']
          %s184 = sand.u32 %s33, 1
          %s185 = scalar_lea.sflag [#allocation3], %s184
          %s186 = sand.u32 %s33, 1
          %s187 = smul.addr %s186, 64
          %s188 = scalar_lea.vmem [#allocation2], %s187
          %s189 = smul.u32 4, %s23
          %191 = vsyncadd %s185, 0
          %s192 = smul.addr %s189, 8
          %s193 = scalar_lea.hbm %s0, %s192
          %s195 = sshll.u32 1, 14
          %s196 = sxor.u32 4294967295, %s195
          %s198 = sld [smem:[#allocation0]]
          %s199 = sadd.s32 2, %s198
          %s201 = sshll.u32 7, 26
          %s202 = sxor.u32 4294967295, %s201
          %s203 = sand.u32 0, %s202
          %s204 = sshll.u32 %s199, 26
          %s205 = sor.u32 %s203, %s204
          %s206 = sshll.u32 %s193, 4
          %s207 = int_to_ptr.hbm [resolvable:$true] %s206
          %s208 = sshll.u32 %s188, 4
          %s209 = int_to_ptr.vmem [resolvable:$true] %s208
          %215 = sst [smem:[#allocation12]] 1536
          %s216 = scalar_lea.smem [#allocation12], 1
          %217 = sst [smem:[%s216]] 512
          %s218 = scalar_lea.smem [#allocation12], 2
          %219 = sst [smem:[%s218]] 4
          %s220 = scalar_lea.smem [#allocation12], 3
          %221 = sst [smem:[%s220]] 128
          %s222 = scalar_lea.smem [#allocation12], 4
          %223 = sst [smem:[%s222]] 128
          %s224 = scalar_lea.smem [#allocation12], 5
          %225 = sst [smem:[%s224]] 8
          %227 = dma.general %s207, 1024, %s209, %s185, [#allocation11], [#allocation12], %s205, 0
        $region24: #{tpu_custom_call.1} parent=19 // pred_fallthru
          _
        // Predicated region
        $region25: #{tpu_custom_call.1} parent=19 // pred_check
          %p228 = pneg %p69
        $region26: #{tpu_custom_call.1} parent=19 // pred_check_branch
          %230 = sbr.rel (%p228) target = $region28
        $region27: #{tpu_custom_call.1} parent=19 // pred_region
          %s231 = sand.u32 %s23, 1
          %s232 = scalar_lea.sflag [#allocation6], %s231
          %s233 = sand.u32 %s59, 1
          %s234 = smul.addr %s233, 4
          %s235 = scalar_lea.vmem [#allocation5], %s234
          %237 = vsyncadd %s232, 0
          %s238 = smul.addr %s23, 2
          %s239 = smul.addr %s238, 2
          %s240 = scalar_lea.hbm %s1, %s239
          %s241 = sshll.u32 %s240, 4
          %s242 = int_to_ptr.hbm [resolvable:$true] %s241
          %s243 = sshll.u32 %s235, 4
          %s244 = int_to_ptr.vmem [resolvable:$true] %s243
          %249 = dma.hbm_to_vmem [thread:$0]  %s242, 64, %s244, %s232, 32, 32, 2
        $region28: #{tpu_custom_call.1} parent=19 // pred_fallthru
          _
      $region20: #{tpu_custom_call.1} parent=5 // pred_fallthru
        _
      %p250 = scmp.le.s32.totalorder 1, %s23
      %p251 = scmp.lt.s32.totalorder %s23, 4
      %p252 = pnand %p250, %p251
      %p253 = pneg %p252
      // Predicated region
      $region29: #{tpu_custom_call.1} parent=5 // pred_check
        _
      $region30: #{tpu_custom_call.1} parent=5 // pred_check_branch
        %255 = sbr.rel (%p252) target = $region32
      $region31: #{tpu_custom_call.1} parent=5 // pred_region
        %s256 = ssub.s32 %s23, 1
        %s257 = sand.u32 %s36, 1
        %s258 = scalar_lea.sflag [#allocation3], %s257
        %s259 = sand.u32 %s36, 1
        %s260 = smul.addr %s259, 64
        %s261 = scalar_lea.vmem [#allocation2], %s260
        // Predicated region
        $region33: #{tpu_custom_call.1} parent=31 // pred_check
          %p262 = pneg %p49
        $region34: #{tpu_custom_call.1} parent=31 // pred_check_branch
          %264 = sbr.rel (%p262) target = $region36
        $region35: #{tpu_custom_call.1} parent=31 // pred_region
          %266 = dma.done %s258, 1024
        $region36: #{tpu_custom_call.1} parent=31 // pred_fallthru
          _
        %s267 = sand.u32 %s28, 1
        %s268 = scalar_lea.sflag [#allocation6], %s267
        %s269 = sand.u32 %s62, 1
        %s270 = smul.addr %s269, 4
        %s271 = scalar_lea.vmem [#allocation5], %s270
        // Predicated region
        $region37: #{tpu_custom_call.1} parent=31 // pred_check
          %p272 = pneg %p75
        $region38: #{tpu_custom_call.1} parent=31 // pred_check_branch
          %274 = sbr.rel (%p272) target = $region40
        $region39: #{tpu_custom_call.1} parent=31 // pred_region
          %276 = dma.done %s268, 64
        $region40: #{tpu_custom_call.1} parent=31 // pred_fallthru
          _
        // Predicated region
        $region41: #{tpu_custom_call.1} parent=31 // pred_check
          %p277 = pneg %p96
        $region42: #{tpu_custom_call.1} parent=31 // pred_check_branch
          %279 = sbr.rel (%p277) target = $region44
        $region43: #{tpu_custom_call.1} parent=31 // pred_region
          %281 = dma.done [#allocation6], 6144
        $region44: #{tpu_custom_call.1} parent=31 // pred_fallthru
          _
        %s282 = sand.u32 %s36, 1
        %s283 = scalar_lea.sflag [#allocation3], %s282
        %s284 = sand.u32 %s36, 1
        %s285 = smul.addr %s284, 64
        %s286 = scalar_lea.vmem [#allocation2], %s285
        %p287 = pneg %p49
        %p288 = pneg %p46
        %s289 = sand.u32 %s28, 1
        %s290 = scalar_lea.sflag [#allocation6], %s289
        %s291 = sand.u32 %s62, 1
        %s292 = smul.addr %s291, 4
        %s293 = scalar_lea.vmem [#allocation5], %s292
        %p294 = pneg %p75
        %p295 = pneg %p72
        %p296 = pneg %p96
        %p297 = pneg %p93
        %p298 = pneg %p122
        %p299 = pneg %p119
        %s300 = sand.u32 %s109, 1
        %s301 = scalar_lea.sflag [#allocation4], %s300
        %s302 = sand.u32 %s109, 1
        %s303 = smul.addr %s302, 64
        %s304 = scalar_lea.vmem [#allocation8], %s303
        %p305 = pneg %p148
        %p306 = pneg %p145
        %s307 = sand.u32 %s135, 1
        %s308 = scalar_lea.sflag [#allocation10], %s307
        %s309 = sand.u32 %s135, 1
        %s310 = smul.addr %s309, 8
        %s311 = scalar_lea.vmem [#allocation9], %s310
        %s312 = smul.u32 4, %s28
        %s313 = smul.u32 4, %s28
        %v314 = vld [vmem:[%s271] sm:$0x1]
        %v315 = vld [vmem:[%s271 + $0x2] sm:$0x1]
        %v316 = vld [vmem:[%s261] sm:$0xff]
        %v317 = vld [vmem:[%s261 + $0x8] sm:$0xff]
        %v318 = vld [vmem:[%s261 + $0x10] sm:$0xff]
        %v319 = vld [vmem:[%s261 + $0x18] sm:$0xff]
        %v320 = vld [vmem:[%s261 + $0x20] sm:$0xff]
        %v321 = vld [vmem:[%s261 + $0x28] sm:$0xff]
        %v322 = vld [vmem:[%s261 + $0x30] sm:$0xff]
        %v323 = vld [vmem:[%s261 + $0x38] sm:$0xff]
        %v324 = vld [vmem:[%s271 + $0x1] sm:$0x1]
        %v325 = vld [vmem:[%s271 + $0x3] sm:$0x1]
        %vm334 = vcmask 1040384
        %v335 = vrot.slane %v316, 7
        %v336 = vrot.slane %v317, 7
        %v337 = vsel %vm334, %v335, %v336
        %v338 = vrot.slane %v318, 7
        %v339 = vsel %vm334, %v336, %v338
        %v340 = vrot.slane %v319, 7
        %v341 = vsel %vm334, %v338, %v340
        %v342 = vrot.slane %v320, 7
        %v343 = vrot.slane %v321, 7
        %v344 = vsel %vm334, %v342, %v343
        %v345 = vrot.slane %v322, 7
        %v346 = vsel %vm334, %v343, %v345
        %v347 = vrot.slane %v323, 7
        %v348 = vsel %vm334, %v345, %v347
        %v361 = vrot.slane %v324, 7
        %v362 = vrot.slane %v325, 7
        %v365 = vsel %vm334, %v314, %v335
        %v366 = vsel %vm334, %v315, %v342
        %v367 = vsel %vm334, %v340, %v361
        %v368 = vsel %vm334, %v347, %v362
        %v369 = vld [vmem:[#allocation7] sm:$0xff]
        %v370 = vld [vmem:[#allocation7 + $0x8] sm:$0xff]
        %v371 = vld [vmem:[#allocation7 + $0x10] sm:$0xff]
        %v372 = vld [vmem:[#allocation7 + $0x18] sm:$0xff]
        %v373 = vld [vmem:[#allocation7 + $0x20] sm:$0xff]
        %v374 = vld [vmem:[#allocation7 + $0x28] sm:$0xff]
        %v375 = vld [vmem:[#allocation7 + $0x30] sm:$0xff]
        %v376 = vld [vmem:[#allocation7 + $0x38] sm:$0xff]
        %v377 = vld [vmem:[#allocation7 + $0x40] sm:$0xff]
        %v378 = vld [vmem:[#allocation7 + $0x48] sm:$0xff]
        %v379 = vld [vmem:[#allocation7 + $0x50] sm:$0xff]
        %v380 = vld [vmem:[#allocation7 + $0x58] sm:$0xff]
        %v381 = vld [vmem:[#allocation7 + $0x60] sm:$0xff]
        %v382 = vld [vmem:[#allocation7 + $0x68] sm:$0xff]
        %v383 = vld [vmem:[#allocation7 + $0x70] sm:$0xff]
        %v384 = vld [vmem:[#allocation7 + $0x78] sm:$0xff]
        %vm389 = vcmask 1046528
        %v390 = vrot.slane %v365, 1
        %v391 = vrot.slane %v337, 1
        %v392 = vsel %vm389, %v390, %v391
        %v393 = vrot.slane %v339, 1
        %v394 = vsel %vm389, %v391, %v393
        %v395 = vrot.slane %v341, 1
        %v396 = vsel %vm389, %v393, %v395
        %v397 = vrot.slane %v367, 1
        %v398 = vsel %vm389, %v395, %v397
        %v399 = vrot.slane %v366, 1
        %v400 = vrot.slane %v344, 1
        %v401 = vsel %vm389, %v399, %v400
        %v402 = vrot.slane %v346, 1
        %v403 = vsel %vm389, %v400, %v402
        %v404 = vrot.slane %v348, 1
        %v405 = vsel %vm389, %v402, %v404
        %v406 = vrot.slane %v368, 1
        %v407 = vsel %vm389, %v404, %v406
        %s416 = scalar_lea.vmem [#allocation7], 128
        %v417 = vld [vmem:[%s416] sm:$0xff]
        %v418 = vld [vmem:[%s416 + $0x8] sm:$0xff]
        %v419 = vld [vmem:[%s416 + $0x10] sm:$0xff]
        %v420 = vld [vmem:[%s416 + $0x18] sm:$0xff]
        %v421 = vld [vmem:[%s416 + $0x20] sm:$0xff]
        %v422 = vld [vmem:[%s416 + $0x28] sm:$0xff]
        %v423 = vld [vmem:[%s416 + $0x30] sm:$0xff]
        %v424 = vld [vmem:[%s416 + $0x38] sm:$0xff]
        %v425 = vld [vmem:[%s416 + $0x40] sm:$0xff]
        %v426 = vld [vmem:[%s416 + $0x48] sm:$0xff]
        %v427 = vld [vmem:[%s416 + $0x50] sm:$0xff]
        %v428 = vld [vmem:[%s416 + $0x58] sm:$0xff]
        %v429 = vld [vmem:[%s416 + $0x60] sm:$0xff]
        %v430 = vld [vmem:[%s416 + $0x68] sm:$0xff]
        %v431 = vld [vmem:[%s416 + $0x70] sm:$0xff]
        %v432 = vld [vmem:[%s416 + $0x78] sm:$0xff]
        %433 = vmatpush.msra.mxu0 %v432
        %434 = vmatpush.msra.mxu0 %v431
        %435 = vmatpush.msra.mxu0 %v430
        %436 = vmatpush.msra.mxu0 %v429
        %437 = vmatpush.msra.mxu0 %v428
        %438 = vmatpush.msra.mxu0 %v427
        %439 = vmatpush.msra.mxu0 %v426
        %440 = vmatpush.msra.mxu0 %v425
        %441 = vmatpush.msra.mxu0 %v424
        %442 = vmatpush.msra.mxu0 %v423
        %443 = vmatpush.msra.mxu0 %v422
        %444 = vmatpush.msra.mxu0 %v421
        %445 = vmatpush.msra.mxu0 %v420
        %446 = vmatpush.msra.mxu0 %v419
        %447 = vmatpush.msra.mxu0 %v418
        %448 = vmatpush.msra.mxu0 %v417
        %449 = vmatmul.f32.gmra.mxu0 %v392
        %v450 = vpop.f32.mrf.mxu0
        %v451 = vadd.f32 0.0, %v450
        %452 = vmatmul.f32.gmra.mxu0 %v394
        %v453 = vpop.f32.mrf.mxu0
        %v454 = vadd.f32 0.0, %v453
        %455 = vmatmul.f32.gmra.mxu0 %v396
        %v456 = vpop.f32.mrf.mxu0
        %v457 = vadd.f32 0.0, %v456
        %458 = vmatmul.f32.gmra.mxu0 %v398
        %v459 = vpop.f32.mrf.mxu0
        %v460 = vadd.f32 0.0, %v459
        %461 = vmatmul.f32.gmra.mxu0 %v401
        %v462 = vpop.f32.mrf.mxu0
        %v463 = vadd.f32 0.0, %v462
        %464 = vmatmul.f32.gmra.mxu0 %v403
        %v465 = vpop.f32.mrf.mxu0
        %v466 = vadd.f32 0.0, %v465
        %467 = vmatmul.f32.gmra.mxu0 %v405
        %v468 = vpop.f32.mrf.mxu0
        %v469 = vadd.f32 0.0, %v468
        %470 = vmatmul.f32.gmra.mxu0 %v407
        %v471 = vpop.f32.mrf.mxu0
        %v472 = vadd.f32 0.0, %v471
        %473 = vdwg.mxu0
        %474 = vmatpush.msra.mxu0 %v384
        %475 = vmatpush.msra.mxu0 %v383
        %476 = vmatpush.msra.mxu0 %v382
        %477 = vmatpush.msra.mxu0 %v381
        %478 = vmatpush.msra.mxu0 %v380
        %479 = vmatpush.msra.mxu0 %v379
        %480 = vmatpush.msra.mxu0 %v378
        %481 = vmatpush.msra.mxu0 %v377
        %482 = vmatpush.msra.mxu0 %v376
        %483 = vmatpush.msra.mxu0 %v375
        %484 = vmatpush.msra.mxu0 %v374
        %485 = vmatpush.msra.mxu0 %v373
        %486 = vmatpush.msra.mxu0 %v372
        %487 = vmatpush.msra.mxu0 %v371
        %488 = vmatpush.msra.mxu0 %v370
        %489 = vmatpush.msra.mxu0 %v369
        %490 = vmatmul.f32.gmra.mxu0 %v365
        %v491 = vpop.f32.mrf.mxu0
        %v492 = vadd.f32 %v451, %v491
        %493 = vmatmul.f32.gmra.mxu0 %v337
        %v494 = vpop.f32.mrf.mxu0
        %v495 = vadd.f32 %v454, %v494
        %496 = vmatmul.f32.gmra.mxu0 %v339
        %v497 = vpop.f32.mrf.mxu0
        %v498 = vadd.f32 %v457, %v497
        %499 = vmatmul.f32.gmra.mxu0 %v341
        %v500 = vpop.f32.mrf.mxu0
        %v501 = vadd.f32 %v460, %v500
        %502 = vmatmul.f32.gmra.mxu0 %v366
        %v503 = vpop.f32.mrf.mxu0
        %v504 = vadd.f32 %v463, %v503
        %505 = vmatmul.f32.gmra.mxu0 %v344
        %v506 = vpop.f32.mrf.mxu0
        %v507 = vadd.f32 %v466, %v506
        %508 = vmatmul.f32.gmra.mxu0 %v346
        %v509 = vpop.f32.mrf.mxu0
        %v510 = vadd.f32 %v469, %v509
        %511 = vmatmul.f32.gmra.mxu0 %v348
        %v512 = vpop.f32.mrf.mxu0
        %v513 = vadd.f32 %v472, %v512
        %514 = vdwg.mxu0
        %vm515 = vcmask 1045504
        %v516 = vrot.slane %v365, 2
        %v517 = vrot.slane %v337, 2
        %v518 = vsel %vm515, %v516, %v517
        %v519 = vrot.slane %v339, 2
        %v520 = vsel %vm515, %v517, %v519
        %v521 = vrot.slane %v341, 2
        %v522 = vsel %vm515, %v519, %v521
        %v523 = vrot.slane %v367, 2
        %v524 = vsel %vm515, %v521, %v523
        %v525 = vrot.slane %v366, 2
        %v526 = vrot.slane %v344, 2
        %v527 = vsel %vm515, %v525, %v526
        %v528 = vrot.slane %v346, 2
        %v529 = vsel %vm515, %v526, %v528
        %v530 = vrot.slane %v348, 2
        %v531 = vsel %vm515, %v528, %v530
        %v532 = vrot.slane %v368, 2
        %v533 = vsel %vm515, %v530, %v532
        %s542 = scalar_lea.vmem [#allocation7], 256
        %v543 = vld [vmem:[%s542] sm:$0xff]
        %v544 = vld [vmem:[%s542 + $0x8] sm:$0xff]
        %v545 = vld [vmem:[%s542 + $0x10] sm:$0xff]
        %v546 = vld [vmem:[%s542 + $0x18] sm:$0xff]
        %v547 = vld [vmem:[%s542 + $0x20] sm:$0xff]
        %v548 = vld [vmem:[%s542 + $0x28] sm:$0xff]
        %v549 = vld [vmem:[%s542 + $0x30] sm:$0xff]
        %v550 = vld [vmem:[%s542 + $0x38] sm:$0xff]
        %v551 = vld [vmem:[%s542 + $0x40] sm:$0xff]
        %v552 = vld [vmem:[%s542 + $0x48] sm:$0xff]
        %v553 = vld [vmem:[%s542 + $0x50] sm:$0xff]
        %v554 = vld [vmem:[%s542 + $0x58] sm:$0xff]
        %v555 = vld [vmem:[%s542 + $0x60] sm:$0xff]
        %v556 = vld [vmem:[%s542 + $0x68] sm:$0xff]
        %v557 = vld [vmem:[%s542 + $0x70] sm:$0xff]
        %v558 = vld [vmem:[%s542 + $0x78] sm:$0xff]
        %559 = vmatpush.msra.mxu0 %v558
        %560 = vmatpush.msra.mxu0 %v557
        %561 = vmatpush.msra.mxu0 %v556
        %562 = vmatpush.msra.mxu0 %v555
        %563 = vmatpush.msra.mxu0 %v554
        %564 = vmatpush.msra.mxu0 %v553
        %565 = vmatpush.msra.mxu0 %v552
        %566 = vmatpush.msra.mxu0 %v551
        %567 = vmatpush.msra.mxu0 %v550
        %568 = vmatpush.msra.mxu0 %v549
        %569 = vmatpush.msra.mxu0 %v548
        %570 = vmatpush.msra.mxu0 %v547
        %571 = vmatpush.msra.mxu0 %v546
        %572 = vmatpush.msra.mxu0 %v545
        %573 = vmatpush.msra.mxu0 %v544
        %574 = vmatpush.msra.mxu0 %v543
        %575 = vmatmul.f32.gmra.mxu0 %v518
        %v576 = vpop.f32.mrf.mxu0
        %v577 = vadd.f32 0.0, %v576
        %578 = vmatmul.f32.gmra.mxu0 %v520
        %v579 = vpop.f32.mrf.mxu0
        %v580 = vadd.f32 0.0, %v579
        %581 = vmatmul.f32.gmra.mxu0 %v522
        %v582 = vpop.f32.mrf.mxu0
        %v583 = vadd.f32 0.0, %v582
        %584 = vmatmul.f32.gmra.mxu0 %v524
        %v585 = vpop.f32.mrf.mxu0
        %v586 = vadd.f32 0.0, %v585
        %587 = vmatmul.f32.gmra.mxu0 %v527
        %v588 = vpop.f32.mrf.mxu0
        %v589 = vadd.f32 0.0, %v588
        %590 = vmatmul.f32.gmra.mxu0 %v529
        %v591 = vpop.f32.mrf.mxu0
        %v592 = vadd.f32 0.0, %v591
        %593 = vmatmul.f32.gmra.mxu0 %v531
        %v594 = vpop.f32.mrf.mxu0
        %v595 = vadd.f32 0.0, %v594
        %596 = vmatmul.f32.gmra.mxu0 %v533
        %v597 = vpop.f32.mrf.mxu0
        %v598 = vadd.f32 0.0, %v597
        %599 = vdwg.mxu0
        %v600 = vadd.f32 %v492, %v577
        %v601 = vadd.f32 %v495, %v580
        %v602 = vadd.f32 %v498, %v583
        %v603 = vadd.f32 %v501, %v586
        %v604 = vadd.f32 %v504, %v589
        %v605 = vadd.f32 %v507, %v592
        %v606 = vadd.f32 %v510, %v595
        %v607 = vadd.f32 %v513, %v598
        %s608 = smul.u32 %s28, 32
        %v609 = vlaneseq
        %v610 = vshrl.u32 %v609, 7
        %v611 = vadd.s32 %v610, 8
        %v612 = vadd.s32 %v610, 16
        %v613 = vadd.s32 %v610, 24
        %v614 = vstv %s608
        %v615 = vadd.s32 %v614, %v610
        %v616 = vadd.s32 %v614, %v611
        %v617 = vadd.s32 %v614, %v612
        %v618 = vadd.s32 %v614, %v613
        %vm619 = vcmp.ge.s32.totalorder %v615, 0
        %vm620 = vcmp.ge.s32.totalorder %v616, 0
        %vm621 = vcmp.ge.s32.totalorder %v617, 0
        %vm622 = vcmp.ge.s32.totalorder %v618, 0
        %vm623 = vcmp.lt.s32.totalorder %v615, 80
        %vm624 = vcmp.lt.s32.totalorder %v616, 80
        %vm625 = vcmp.lt.s32.totalorder %v617, 80
        %vm626 = vcmp.lt.s32.totalorder %v618, 80
        %vm627 = vmand %vm619, %vm623
        %vm628 = vmand %vm620, %vm624
        %vm629 = vmand %vm621, %vm625
        %vm630 = vmand %vm622, %vm626
        %v631 = vsel %vm627, 1, 0
        %v632 = vsel %vm628, 1, 0
        %v633 = vsel %vm629, 1, 0
        %v634 = vsel %vm630, 1, 0
        %vm635 = vcmp.eq.s32.totalorder %v631, 1
        %vm636 = vcmp.eq.s32.totalorder %v632, 1
        %vm637 = vcmp.eq.s32.totalorder %v633, 1
        %vm638 = vcmp.eq.s32.totalorder %v634, 1
        %v639 = vsel %vm635, %v600, 0.0
        %v640 = vsel %vm636, %v601, 0.0
        %v641 = vsel %vm637, %v602, 0.0
        %v642 = vsel %vm638, %v603, 0.0
        %v643 = vsel %vm635, %v604, 0.0
        %v644 = vsel %vm636, %v605, 0.0
        %v645 = vsel %vm637, %v606, 0.0
        %v646 = vsel %vm638, %v607, 0.0
        %647 = vst [vmem:[%s304] sm:$0xff] %v639
        %648 = vst [vmem:[%s304 + $0x8] sm:$0xff] %v640
        %649 = vst [vmem:[%s304 + $0x10] sm:$0xff] %v641
        %650 = vst [vmem:[%s304 + $0x18] sm:$0xff] %v642
        %651 = vst [vmem:[%s304 + $0x20] sm:$0xff] %v643
        %652 = vst [vmem:[%s304 + $0x28] sm:$0xff] %v644
        %653 = vst [vmem:[%s304 + $0x30] sm:$0xff] %v645
        %654 = vst [vmem:[%s304 + $0x38] sm:$0xff] %v646
        %v655 = vadd.f32 %v639, %v640
        %v656 = vadd.f32 %v655, %v641
        %v657 = vadd.f32 %v656, %v642
        %v658 = vadd.f32 %v657, %v643
        %v659 = vadd.f32 %v658, %v644
        %v660 = vadd.f32 %v659, %v645
        %v661 = vadd.f32 %v660, %v646
        %v662 = vrot.slane %v661, 4
        %v663 = vadd.f32 %v661, %v662
        %v664 = vrot.slane %v663, 2
        %v665 = vadd.f32 %v663, %v664
        %v666 = vrot.slane %v665, 1
        %v667 = vadd.f32 %v665, %v666
        %668 = vst [vmem:[%s311] sm:$0x1] %v667
        %v669 = vmul.f32 %v639, %v639
        %v670 = vmul.f32 %v640, %v640
        %v671 = vmul.f32 %v641, %v641
        %v672 = vmul.f32 %v642, %v642
        %v673 = vmul.f32 %v643, %v643
        %v674 = vmul.f32 %v644, %v644
        %v675 = vmul.f32 %v645, %v645
        %v676 = vmul.f32 %v646, %v646
        %v677 = vadd.f32 %v669, %v670
        %v678 = vadd.f32 %v677, %v671
        %v679 = vadd.f32 %v678, %v672
        %v680 = vadd.f32 %v679, %v673
        %v681 = vadd.f32 %v680, %v674
        %v682 = vadd.f32 %v681, %v675
        %v683 = vadd.f32 %v682, %v676
        %v684 = vrot.slane %v683, 4
        %v685 = vadd.f32 %v683, %v684
        %v686 = vrot.slane %v685, 2
        %v687 = vadd.f32 %v685, %v686
        %v688 = vrot.slane %v687, 1
        %v689 = vadd.f32 %v687, %v688
        %690 = vst [vmem:[%s311 + $0x1] sm:$0x1] %v689
        %s691 = sand.u32 %s109, 1
        %s692 = scalar_lea.sflag [#allocation4], %s691
        %s693 = sand.u32 %s109, 1
        %s694 = smul.addr %s693, 64
        %s695 = scalar_lea.vmem [#allocation8], %s694
        %s696 = sand.u32 %s135, 1
        %s697 = scalar_lea.sflag [#allocation10], %s696
        %s698 = sand.u32 %s135, 1
        %s699 = smul.addr %s698, 8
        %s700 = scalar_lea.vmem [#allocation9], %s699
        // Predicated region
        $region45: #{tpu_custom_call.1} parent=31 // pred_check
          %p701 = pneg %p119
        $region46: #{tpu_custom_call.1} parent=31 // pred_check_branch
          %703 = sbr.rel (%p701) target = $region48
        $region47: #{tpu_custom_call.1} parent=31 // pred_region
          #allocation14 [shape = 'u32[6]{0}', space=smem, size = 0x18, scoped, tag = 'DMA stride descriptor']
          %s704 = smul.u32 4, %s28
          %706 = vsyncadd %s692, 0
          %s707 = smul.addr %s704, 8
          %s708 = scalar_lea.hbm %s3, %s707
          %s710 = sshll.u32 1, 14
          %s711 = sxor.u32 4294967295, %s710
          %s714 = sshll.u32 7, 18
          %s715 = sxor.u32 4294967295, %s714
          %s716 = sand.u32 0, %s715
          %s718 = sor.u32 %s716, 0
          %s719 = sshll.u32 %s695, 4
          %s720 = int_to_ptr.vmem [resolvable:$true] %s719
          %s721 = sshll.u32 %s708, 4
          %s722 = int_to_ptr.hbm [resolvable:$true] %s721
          %728 = sst [smem:[#allocation14]] 512
          %s729 = scalar_lea.smem [#allocation14], 1
          %730 = sst [smem:[%s729]] 1536
          %s731 = scalar_lea.smem [#allocation14], 2
          %732 = sst [smem:[%s731]] 4
          %s733 = scalar_lea.smem [#allocation14], 3
          %734 = sst [smem:[%s733]] 128
          %s735 = scalar_lea.smem [#allocation14], 4
          %736 = sst [smem:[%s735]] 128
          %s737 = scalar_lea.smem [#allocation14], 5
          %738 = sst [smem:[%s737]] 8
          %740 = dma.general %s720, 1024, %s722, %s692, [#allocation13], [#allocation14], %s718, 0
        $region48: #{tpu_custom_call.1} parent=31 // pred_fallthru
          _
        // Predicated region
        $region49: #{tpu_custom_call.1} parent=31 // pred_check
          %p741 = pneg %p145
        $region50: #{tpu_custom_call.1} parent=31 // pred_check_branch
          %743 = sbr.rel (%p741) target = $region52
        $region51: #{tpu_custom_call.1} parent=31 // pred_region
          %745 = vsyncadd %s697, 0
          %s746 = smul.addr %s28, 8
          %s747 = scalar_lea.hbm %s4, %s746
          %s749 = sshll.u32 %s700, 4
          %s750 = int_to_ptr.vmem [resolvable:$true] %s749
          %s751 = sshll.u32 %s747, 4
          %s752 = int_to_ptr.hbm [resolvable:$true] %s751
          %754 = dma.vmem_to_hbm [thread:$0]  %s750, 128, %s752, %s697
        $region52: #{tpu_custom_call.1} parent=31 // pred_fallthru
          _
      $region32: #{tpu_custom_call.1} parent=5 // pred_fallthru
        _
      %p755 = scmp.le.s32.totalorder 2, %s23
      // Predicated region
      $region53: #{tpu_custom_call.1} parent=5 // pred_check
        %p756 = pneg %p755
      $region54: #{tpu_custom_call.1} parent=5 // pred_check_branch
        %758 = sbr.rel (%p756) target = $region56
      $region55: #{tpu_custom_call.1} parent=5 // pred_region
        %s759 = ssub.s32 %s23, 2
        // Predicated region
        $region57: #{tpu_custom_call.1} parent=55 // pred_check
          %p760 = pneg %p125
        $region58: #{tpu_custom_call.1} parent=55 // pred_check_branch
          %762 = sbr.rel (%p760) target = $region60
        $region59: #{tpu_custom_call.1} parent=55 // pred_region
          %s763 = sand.u32 %s110, 1
          %s764 = scalar_lea.sflag [#allocation4], %s763
          %s765 = sand.u32 %s110, 1
          %s766 = smul.addr %s765, 64
          %s767 = scalar_lea.vmem [#allocation8], %s766
          %769 = dma.done %s764, 1024
        $region60: #{tpu_custom_call.1} parent=55 // pred_fallthru
          _
        // Predicated region
        $region61: #{tpu_custom_call.1} parent=55 // pred_check
          %p770 = pneg %p151
        $region62: #{tpu_custom_call.1} parent=55 // pred_check_branch
          %772 = sbr.rel (%p770) target = $region64
        $region63: #{tpu_custom_call.1} parent=55 // pred_region
          %s773 = sand.u32 %s136, 1
          %s774 = scalar_lea.sflag [#allocation10], %s773
          %s775 = sand.u32 %s136, 1
          %s776 = smul.addr %s775, 8
          %s777 = scalar_lea.vmem [#allocation9], %s776
          %779 = dma.done %s774, 128
        $region64: #{tpu_custom_call.1} parent=55 // pred_fallthru
          _
      $region56: #{tpu_custom_call.1} parent=5 // pred_fallthru
        _
    $region6: #{tpu_custom_call.1} parent=1 // loop_footer
      %s27 = sadd.s32 1, %s23
    $region7: #{tpu_custom_call.1} parent=1 // loop_footer_branch
      %22 = sbr.rel target = $region3
    $region8: #{tpu_custom_call.1} parent=1 // loop_exit
      _
    %780 = vsyncpa [#allocation3], 1
    %s781 = scalar_lea.sflag [#allocation3], 1
    %782 = vsyncpa %s781, 1
    %783 = vsyncpa [#allocation6], 1
    %s784 = scalar_lea.sflag [#allocation6], 1
    %785 = vsyncpa %s784, 1
    %786 = vsyncpa [#allocation4], 1
    %s787 = scalar_lea.sflag [#allocation4], 1
    %788 = vsyncpa %s787, 1
    %789 = vsyncpa [#allocation10], 1
    %s790 = scalar_lea.sflag [#allocation10], 1
    %791 = vsyncpa %s790, 1

</llo_original>
